<compile_context>
chip_gen: v6e
topology: v6e:2x2x1
jax: 0.10.0
libtpu: 0.0.40
codegen_flags: <defaults>
</compile_context>

<pallas_src>
import jax
import jax.numpy as jnp
from jax.experimental import pallas as pl
from jax.experimental.pallas import tpu as pltpu


def _refexp_kernel(x_ref, txt_ref,
                   w_img_ref, b_img_ref,
                   w_txt_ref, b_txt_ref,
                   w_sc_ref, b_sc_ref,
                   out_ref, t_hid_ref):
    # x_ref:     (1, C, THW)  image features (channels on sublanes, pixels on lanes)
    # txt_ref:   (1, D, T)    word embeddings (transposed) for this batch item
    # w_img_ref: (HID, C)     1x1-conv weight, pre-transposed
    # b_img_ref: (HID, 1)
    # w_txt_ref: (HID, D)     text fc weight, pre-transposed
    # b_txt_ref: (HID, 1)
    # w_sc_ref:  (1, HID)     score projection
    # b_sc_ref:  (1, 1)       scalar bias, lives in SMEM
    # out_ref:   (1, 1, THW)  per-pixel referring score (lane-dense)
    # t_hid_ref: (HID, 1)     VMEM scratch, persists across the HW grid axis

    j = pl.program_id(1)

    # --- text branch: computed once per batch item (hw tile 0), then resident ---
    @pl.when(j == 0)
    def _():
        txt = txt_ref[0]                                     # (D, T)
        txt_mean = jnp.mean(txt, axis=1, keepdims=True)      # (D, 1)
        t = jnp.dot(w_txt_ref[...], txt_mean,
                    preferred_element_type=jnp.float32)      # (HID, 1)
        t_hid_ref[...] = jnp.tanh(t + b_txt_ref[...])

    # --- image branch: 1x1 conv as (HID, C) @ (C, THW) MXU matmul, ReLU ---
    x = x_ref[0]                                             # (C, THW)
    i_hid = jnp.dot(w_img_ref[...], x,
                    preferred_element_type=jnp.float32)      # (HID, THW) f32
    i_hid = jnp.maximum(i_hid + b_img_ref[...], 0.0)

    # --- fusion: broadcast text hidden over pixels (lanes), ReLU ---
    fused = jnp.maximum(i_hid * t_hid_ref[...], 0.0)         # (HID, THW) f32

    # --- score head: lane-dense (1, THW) row straight into the output ---
    score = jnp.dot(w_sc_ref[...], fused.astype(w_sc_ref.dtype),
                    preferred_element_type=jnp.float32)      # (1, THW)
    out_ref[0] = (score + b_sc_ref[0, 0]).astype(out_ref.dtype)


def _pick_hw_tile(hw, max_tile):
    """Largest multiple-of-128 divisor of hw that is <= max_tile (or hw itself)."""
    if hw <= max_tile:
        return hw
    t = (max_tile // 128) * 128
    while t >= 128:
        if hw % t == 0:
            return t
        t -= 128
    return hw  # no 128-multiple divisor: fall back to a single block


def refexp_vanilla_forward(x_nchw, txt_btd, params, *,
                           compute_dtype=jnp.float32, max_hw_tile=2048):
    """x_nchw: [B, C, H, W] image feature map; txt_btd: [B, T, D] word embeds."""
    B, C, H, W = x_nchw.shape
    _, T, D = txt_btd.shape
    HID = params["w_img"].shape[1]
    HW = H * W
    THW = _pick_hw_tile(HW, max_hw_tile)
    n_hw_tiles = HW // THW

    # Free reshape of NCHW (same memory layout): channels->sublanes, pixels->lanes.
    # No HBM transpose of the (large) feature map.
    x_chw = x_nchw.reshape(B, C, HW).astype(compute_dtype)

    # Tiny tensors only: layout glue (transposes of weights / word embeddings).
    txt_bdt = jnp.transpose(txt_btd, (0, 2, 1))                # (B, D, T)
    w_img_t = params["w_img"].T.astype(compute_dtype)          # (HID, C)
    b_img_c = params["b_img"].reshape(HID, 1)                  # (HID, 1) f32
    w_txt_t = params["w_txt"].T                                # (HID, D) f32
    b_txt_c = params["b_txt"].reshape(HID, 1)                  # (HID, 1) f32
    w_sc = params["w_score"].astype(compute_dtype)             # (1, HID)
    b_sc = params["b_score"].reshape(1, 1)                     # (1, 1) -> SMEM

    full = lambda arr: pl.BlockSpec(arr.shape, lambda b, j: (0,) * arr.ndim)

    bpe = jnp.dtype(compute_dtype).itemsize
    cost = pl.CostEstimate(
        flops=(2 * B * HW * HID * (C + 1)          # image matmul + score matmul
               + 4 * B * HW * HID                  # bias / relu / fuse / relu
               + 2 * B * HID * (D + T)),           # text branch
        transcendentals=B * HID,                   # tanh
        bytes_accessed=(x_chw.size * bpe + txt_bdt.size * 4
                        + (w_img_t.size + w_sc.size) * bpe
                        + (w_txt_t.size + b_img_c.size + b_txt_c.size + 1) * 4
                        + B * HW * 4),
    )

    out = pl.pallas_call(
        _refexp_kernel,
        out_shape=jax.ShapeDtypeStruct((B, 1, HW), jnp.float32),
        grid_spec=pltpu.PrefetchScalarGridSpec(
            num_scalar_prefetch=0,
            grid=(B, n_hw_tiles),
            in_specs=[
                pl.BlockSpec((1, C, THW), lambda b, j: (b, 0, j)),   # x tile
                pl.BlockSpec((1, D, T), lambda b, j: (b, 0, 0)),     # text (const over j)
                full(w_img_t), full(b_img_c),
                full(w_txt_t), full(b_txt_c),
                full(w_sc),
                pl.BlockSpec(memory_space=pltpu.MemorySpace.SMEM),   # b_score scalar
            ],
            out_specs=pl.BlockSpec((1, 1, THW), lambda b, j: (b, 0, j)),
            scratch_shapes=[pltpu.VMEM((HID, 1), jnp.float32)],      # text hidden
        ),
        compiler_params=pltpu.CompilerParams(
            # batch axis megacore-parallel; HW axis "arbitrary" because the
            # text-hidden scratch is carried across it.
            dimension_semantics=("parallel", "arbitrary"),
            vmem_limit_bytes=48 * 1024 * 1024,
        ),
        cost_estimate=cost,
    )(x_chw, txt_bdt, w_img_t, b_img_c, w_txt_t, b_txt_c, w_sc, b_sc)

    # [B, 1, HW] -> [B, 1, H, W]: free reshape (score map, NCHW like PyTorch).
    return out.reshape(B, 1, H, W)


def init_params(key, C, D, HID):
    k1, k2, k3 = jax.random.split(key, 3)
    return {
        "w_img": jax.random.normal(k1, (C, HID), jnp.float32) * 0.1,
        "b_img": jnp.zeros((1, HID), jnp.float32),
        "w_txt": jax.random.normal(k2, (D, HID), jnp.float32) * 0.1,
        "b_txt": jnp.zeros((1, HID), jnp.float32),
        "w_score": jax.random.normal(k3, (1, HID), jnp.float32) * 0.1,
        "b_score": jnp.zeros((1, 1), jnp.float32),
    }


def _reference(x_nchw, txt_btd, params):
    # pure-JAX reference (standard layout) for a sanity check
    B, C, H, W = x_nchw.shape
    x_tok = jnp.transpose(x_nchw, (0, 2, 3, 1)).reshape(B, H * W, C)
    t = jnp.tanh(jnp.mean(txt_btd, axis=1) @ params["w_txt"] + params["b_txt"])
    i = jnp.maximum(jnp.einsum("bnc,ch->bnh", x_tok, params["w_img"])
                    + params["b_img"], 0.0)
    fused = jnp.maximum(i * t[:, None, :], 0.0)
    score = jnp.sum(fused * params["w_score"][0], axis=-1) + params["b_score"][0, 0]
    return score.reshape(B, 1, H, W)


if __name__ == "__main__":
    keys = jax.random.split(jax.random.PRNGKey(0), 6)

    # --- small config (matches the toy shapes of the module) ---
    B, C, H, W = 2, 4, 16, 16     # image feature map (NCHW)
    T, D, HID = 8, 32, 32         # words, embed dim, hidden dim

    x = jax.random.normal(keys[0], (B, C, H, W), jnp.float32)
    txt = jax.random.normal(keys[1], (B, T, D), jnp.float32)
    params = init_params(keys[2], C, D, HID)
    ref = _reference(x, txt, params)

    # f32 matmul path (single HW tile per batch item)
    out = jax.block_until_ready(refexp_vanilla_forward(x, txt, params))
    assert out.shape == (B, 1, H, W)
    assert jnp.allclose(out, ref, atol=1e-4, rtol=1e-4)

    # bf16 matmul operands (f32 accumulation): looser tolerance
    out_bf16 = jax.block_until_ready(
        refexp_vanilla_forward(x, txt, params, compute_dtype=jnp.bfloat16))
    assert jnp.allclose(out_bf16, ref, atol=3e-2, rtol=3e-2)

    # --- larger spatial map, forced small HW tile: exercises the multi-tile
    #     grid path (scratch carried across the HW axis, 2 tiles per batch) ---
    B2, C2, H2, W2 = 2, 8, 32, 32
    x2 = jax.random.normal(keys[3], (B2, C2, H2, W2), jnp.float32)
    txt2 = jax.random.normal(keys[4], (B2, T, D), jnp.float32)
    params2 = init_params(keys[5], C2, D, HID)
    out2 = jax.block_until_ready(
        refexp_vanilla_forward(x2, txt2, params2, max_hw_tile=512))
    assert jnp.allclose(out2, _reference(x2, txt2, params2), atol=1e-4, rtol=1e-4)

    print("KERNEL_OK")
</pallas_src>

<mosaic_0001>
module attributes {stable_mosaic.version = 11 : i64} {
  func.func @_refexp_kernel(%arg0: i32, %arg1: i32, %arg2: memref<1x4x256xf32, #tpu.memory_space<vmem>>, %arg3: memref<1x32x8xf32, #tpu.memory_space<vmem>>, %arg4: memref<32x4xf32, #tpu.memory_space<vmem>>, %arg5: memref<32x1xf32, #tpu.memory_space<vmem>>, %arg6: memref<32x32xf32, #tpu.memory_space<vmem>>, %arg7: memref<32x1xf32, #tpu.memory_space<vmem>>, %arg8: memref<1x32xf32, #tpu.memory_space<vmem>>, %arg9: memref<1x1xf32, #tpu.memory_space<smem>>, %arg10: memref<1x1x256xf32, #tpu.memory_space<vmem>>, %arg11: memref<32x1xf32, #tpu.memory_space<vmem>>) attributes {dimension_semantics = [#tpu.dimension_semantics<parallel>, #tpu.dimension_semantics<arbitrary>], iteration_bounds = array<i64: 2, 1>, scalar_prefetch = 0 : i64, scratch_operands = 1 : i64, tpu.core_type = #tpu.core_type<tc>, window_params = [{transform_indices = @transform_0, window_bounds = array<i64: 1, 4, 256>}, {transform_indices = @transform_1, window_bounds = array<i64: 1, 32, 8>}, {pipeline_mode = #tpu.pipeline_mode<synchronous>, transform_indices = @transform_2, window_bounds = array<i64: 32, 4>}, {pipeline_mode = #tpu.pipeline_mode<synchronous>, transform_indices = @transform_3, window_bounds = array<i64: 32, 1>}, {pipeline_mode = #tpu.pipeline_mode<synchronous>, transform_indices = @transform_4, window_bounds = array<i64: 32, 32>}, {pipeline_mode = #tpu.pipeline_mode<synchronous>, transform_indices = @transform_5, window_bounds = array<i64: 32, 1>}, {pipeline_mode = #tpu.pipeline_mode<synchronous>, transform_indices = @transform_6, window_bounds = array<i64: 1, 32>}, {transform_indices = @transform_7, window_bounds = array<i64: 1, 1>}, {transform_indices = @transform_8, window_bounds = array<i64: 1, 1, 256>}]} {
    %c0_i32 = arith.constant 0 : i32
    %0 = arith.cmpi eq, %arg1, %c0_i32 : i32
    %1 = arith.extui %0 : i1 to i32
    %c0_i32_0 = arith.constant 0 : i32
    %2 = arith.cmpi ne, %1, %c0_i32_0 : i32
    scf.if %2 {
      %c0_19 = arith.constant 0 : index
      %c0_20 = arith.constant 0 : index
      %c0_21 = arith.constant 0 : index
      %25 = vector.load %arg3[%c0_19, %c0_20, %c0_21] : memref<1x32x8xf32, #tpu.memory_space<vmem>>, vector<1x32x8xf32>
      %26 = vector.shape_cast %25 : vector<1x32x8xf32> to vector<32x8xf32>
      %cst_22 = arith.constant dense<0.000000e+00> : vector<32xf32>
      %27 = vector.multi_reduction <add>, %26, %cst_22 [1] : vector<32x8xf32> to vector<32xf32>
      %28 = vector.shape_cast %27 : vector<32xf32> to vector<32x1xf32>
      %cst_23 = arith.constant 8.000000e+00 : f32
      %29 = vector.broadcast %cst_23 : f32 to vector<32x1xf32>
      %30 = arith.divf %28, %29 : vector<32x1xf32>
      %c0_24 = arith.constant 0 : index
      %c0_25 = arith.constant 0 : index
      %31 = vector.load %arg6[%c0_24, %c0_25] : memref<32x32xf32, #tpu.memory_space<vmem>>, vector<32x32xf32>
      %cst_26 = arith.constant dense<0.000000e+00> : vector<32x1xf32>
      %32 = tpu.matmul %31, %30, %cst_26 {dimension_numbers = #tpu.dot_dimension_numbers<[1], [0], [0], [1], [0, 0, 1, 1], [], []>} : vector<32x32xf32>, vector<32x1xf32>, vector<32x1xf32> -> vector<32x1xf32>
      %c0_27 = arith.constant 0 : index
      %c0_28 = arith.constant 0 : index
      %33 = vector.load %arg7[%c0_27, %c0_28] : memref<32x1xf32, #tpu.memory_space<vmem>>, vector<32x1xf32>
      %34 = arith.addf %32, %33 : vector<32x1xf32>
      %35 = math.tanh %34 : vector<32x1xf32>
      %c0_29 = arith.constant 0 : index
      %c0_30 = arith.constant 0 : index
      %36 = vector.load %arg11[%c0_29, %c0_30] : memref<32x1xf32, #tpu.memory_space<vmem>>, vector<32x1xf32>
      tpu.vector_store %arg11[%c0_29, %c0_30], %35 {strides = array<i32>} : memref<32x1xf32, #tpu.memory_space<vmem>>, vector<32x1xf32>,
    } else {
    }
    %c0 = arith.constant 0 : index
    %c0_1 = arith.constant 0 : index
    %c0_2 = arith.constant 0 : index
    %3 = vector.load %arg2[%c0, %c0_1, %c0_2] : memref<1x4x256xf32, #tpu.memory_space<vmem>>, vector<1x4x256xf32>
    %4 = vector.shape_cast %3 : vector<1x4x256xf32> to vector<4x256xf32>
    %c0_3 = arith.constant 0 : index
    %c0_4 = arith.constant 0 : index
    %5 = vector.load %arg4[%c0_3, %c0_4] : memref<32x4xf32, #tpu.memory_space<vmem>>, vector<32x4xf32>
    %cst = arith.constant dense<0.000000e+00> : vector<32x256xf32>
    %6 = tpu.matmul %5, %4, %cst {dimension_numbers = #tpu.dot_dimension_numbers<[1], [0], [0], [1], [0, 0, 1, 1], [], []>} : vector<32x4xf32>, vector<4x256xf32>, vector<32x256xf32> -> vector<32x256xf32>
    %c0_5 = arith.constant 0 : index
    %c0_6 = arith.constant 0 : index
    %7 = vector.load %arg5[%c0_5, %c0_6] : memref<32x1xf32, #tpu.memory_space<vmem>>, vector<32x1xf32>
    %8 = vector.broadcast %7 : vector<32x1xf32> to vector<32x256xf32>
    %9 = arith.addf %6, %8 : vector<32x256xf32>
    %cst_7 = arith.constant 0.000000e+00 : f32
    %10 = vector.broadcast %cst_7 : f32 to vector<32x256xf32>
    %11 = arith.maximumf %9, %10 : vector<32x256xf32>
    %c0_8 = arith.constant 0 : index
    %c0_9 = arith.constant 0 : index
    %12 = vector.load %arg11[%c0_8, %c0_9] : memref<32x1xf32, #tpu.memory_space<vmem>>, vector<32x1xf32>
    %13 = vector.broadcast %12 : vector<32x1xf32> to vector<32x256xf32>
    %14 = arith.mulf %11, %13 : vector<32x256xf32>
    %cst_10 = arith.constant 0.000000e+00 : f32
    %15 = vector.broadcast %cst_10 : f32 to vector<32x256xf32>
    %16 = arith.maximumf %14, %15 : vector<32x256xf32>
    %c0_11 = arith.constant 0 : index
    %c0_12 = arith.constant 0 : index
    %17 = vector.load %arg8[%c0_11, %c0_12] : memref<1x32xf32, #tpu.memory_space<vmem>>, vector<1x32xf32>
    %cst_13 = arith.constant dense<0.000000e+00> : vector<1x256xf32>
    %18 = tpu.matmul %17, %16, %cst_13 {dimension_numbers = #tpu.dot_dimension_numbers<[1], [0], [0], [1], [0, 0, 1, 1], [], []>} : vector<1x32xf32>, vector<32x256xf32>, vector<1x256xf32> -> vector<1x256xf32>
    %c0_14 = arith.constant 0 : index
    %c0_15 = arith.constant 0 : index
    %19 = memref.load %arg9[%c0_14, %c0_15] : memref<1x1xf32, #tpu.memory_space<smem>>
    %20 = vector.broadcast %19 : f32 to vector<1x256xf32>
    %21 = arith.addf %18, %20 : vector<1x256xf32>
    %c0_16 = arith.constant 0 : index
    %c0_17 = arith.constant 0 : index
    %c0_18 = arith.constant 0 : index
    %22 = vector.load %arg10[%c0_16, %c0_17, %c0_18] : memref<1x1x256xf32, #tpu.memory_space<vmem>>, vector<1x1x256xf32>
    %23 = vector.shape_cast %22 : vector<1x1x256xf32> to vector<1x256xf32>
    %24 = vector.shape_cast %21 : vector<1x256xf32> to vector<1x1x256xf32>
    tpu.vector_store %arg10[%c0_16, %c0_17, %c0_18], %24 {strides = array<i32>} : memref<1x1x256xf32, #tpu.memory_space<vmem>>, vector<1x1x256xf32>,
    return
  }
  func.func @transform_0(%arg0: i32, %arg1: i32) -> (i32, i32, i32) {
    %c0_i32 = arith.constant 0 : i32
    %c0_i32_0 = arith.constant 0 : i32
    return %arg0, %c0_i32, %arg1 : i32, i32, i32
  }
  func.func @transform_1(%arg0: i32, %arg1: i32) -> (i32, i32, i32) {
    %c0_i32 = arith.constant 0 : i32
    %c0_i32_0 = arith.constant 0 : i32
    %c0_i32_1 = arith.constant 0 : i32
    return %arg0, %c0_i32, %c0_i32_0 : i32, i32, i32
  }
  func.func @transform_2(%arg0: i32, %arg1: i32) -> (i32, i32) {
    %c0_i32 = arith.constant 0 : i32
    %c0_i32_0 = arith.constant 0 : i32
    %c0_i32_1 = arith.constant 0 : i32
    return %c0_i32, %c0_i32_0 : i32, i32
  }
  func.func @transform_3(%arg0: i32, %arg1: i32) -> (i32, i32) {
    %c0_i32 = arith.constant 0 : i32
    %c0_i32_0 = arith.constant 0 : i32
    %c0_i32_1 = arith.constant 0 : i32
    return %c0_i32, %c0_i32_0 : i32, i32
  }
  func.func @transform_4(%arg0: i32, %arg1: i32) -> (i32, i32) {
    %c0_i32 = arith.constant 0 : i32
    %c0_i32_0 = arith.constant 0 : i32
    %c0_i32_1 = arith.constant 0 : i32
    return %c0_i32, %c0_i32_0 : i32, i32
  }
  func.func @transform_5(%arg0: i32, %arg1: i32) -> (i32, i32) {
    %c0_i32 = arith.constant 0 : i32
    %c0_i32_0 = arith.constant 0 : i32
    %c0_i32_1 = arith.constant 0 : i32
    return %c0_i32, %c0_i32_0 : i32, i32
  }
  func.func @transform_6(%arg0: i32, %arg1: i32) -> (i32, i32) {
    %c0_i32 = arith.constant 0 : i32
    %c0_i32_0 = arith.constant 0 : i32
    %c0_i32_1 = arith.constant 0 : i32
    return %c0_i32, %c0_i32_0 : i32, i32
  }
  func.func @transform_7(%arg0: i32, %arg1: i32) -> (i32, i32) {
    %c0_i32 = arith.constant 0 : i32
    %c0_i32_0 = arith.constant 0 : i32
    %c0_i32_1 = arith.constant 0 : i32
    return %c0_i32, %c0_i32_0 : i32, i32
  }
  func.func @transform_8(%arg0: i32, %arg1: i32) -> (i32, i32, i32) {
    %c0_i32 = arith.constant 0 : i32
    %c0_i32_0 = arith.constant 0 : i32
    return %arg0, %c0_i32, %arg1 : i32, i32, i32
  }
}

</mosaic_0001>

<llo_original>
// kernel: tpu_custom_call.1
$region0: #{tpu_custom_call.1}
  #allocation0 [shape = 'u32[]', space=smem, size = 0x4, offset = 0x4, fixed_abs, tag = 'smem constant byte address 0x4 - core index']
  #allocation1 [shape = 'u32[144,128]{1,0:T(1,128)}', space=vmem, size = 0x12000, scoped, tag = 'internal scratch']
  #allocation2 [shape = 'f32[32,1]{1,0:T(8,128)}', space=vmem, size = 0x4000, scoped, tag = 'scratch operand']
  #allocation3 [shape = 'f32[1,1]{1,0:T(1,128)S(6)}', space=smem, size = 0x200, scoped, tag = 'scoped memory for tpu_custom_call.1']
  %s0 = inlined_call_operand.vmem [shape: f32[2,4,256], index: 0, kind: input, shape index: {}]
  %s1 = inlined_call_operand.vmem [shape: f32[2,32,8], index: 1, kind: input, shape index: {}]
  %s2 = inlined_call_operand.vmem [shape: f32[32,4], index: 2, kind: input, shape index: {}]
  %s3 = inlined_call_operand.vmem [shape: f32[32,1], index: 3, kind: input, shape index: {}]
  %s4 = inlined_call_operand.vmem [shape: f32[32,32], index: 4, kind: input, shape index: {}]
  %s5 = inlined_call_operand.vmem [shape: f32[32,1], index: 5, kind: input, shape index: {}]
  %s6 = inlined_call_operand.vmem [shape: f32[1,32], index: 6, kind: input, shape index: {}]
  %s7 = inlined_call_operand.<no memory space> [shape: f32[1,1], index: 7, kind: input, shape index: {}]
  %s8 = inlined_call_operand.hbm [shape: f32[2,1,256], index: 8, kind: output, shape index: {}]
  %s9 = sld [smem:[#allocation0]]
  $region69: #{tpu_custom_call.1} parent=0
    _
  %s11 = ssub.s32 1, %s9
  %s12 = scalar_select 0, %s11, %s9
  %13 = sst [smem:[#allocation3]] %s7
  $region1: #{tpu_custom_call.1} parent=0
    #allocation4 [shape = 'u8[2048]{0}', space=vmem, size = 0x800, scoped, tag = 'output window, operand 0']
    #allocation5 [shape = 's32[2]{0}', space=sflag, size = 0x8, scoped, tag = 'scoped memory for tpu_custom_call.1']
    %14 = vsyncpa [#allocation5], 0
    %s15 = scalar_lea.sflag [#allocation5], 1
    %16 = vsyncpa %s15, 0
    loop: start=0, step=1, limit=4
    $region2: #{tpu_custom_call.1} parent=1 // loop_pre_header
      _
    $region3: #{tpu_custom_call.1} parent=1 // loop_header
      %s18 = sphi 0, %s22
      %p19 = scmp.ge.s32.totalorder %s18, 4
      %s25 = sphi 0, %s37
      %s26 = sphi 0, %s33
      %s27 = sphi 0, %s25
      %s28 = sphi 0, %s26
      %s29 = sphi 0, %s27
      %s30 = sphi 0, %s28
      %s42 = sphi 0, %s44
      %s45 = sphi 0, %s42
      %s46 = sphi 0, %s45
      %s62 = sphi 0, %s46
      %s68 = sphi 0, %s70
      %s71 = sphi 0, %s68
      %s72 = sphi 0, %s71
      %s88 = sphi 0, %s72
      %s92 = sphi 0, %s92
      %s94 = sphi 0, %s92
      %s95 = sphi 0, %s94
      %s109 = sphi 0, %s95
      %s113 = sphi 0, %s113
      %s115 = sphi 0, %s113
      %s116 = sphi 0, %s115
      %s130 = sphi 0, %s116
      %s134 = sphi 0, %s134
      %s136 = sphi 0, %s134
      %s137 = sphi 0, %s136
      %s151 = sphi 0, %s137
      %s155 = sphi 0, %s155
      %s157 = sphi 0, %s155
      %s158 = sphi 0, %s157
      %s172 = sphi 0, %s158
      %s176 = sphi 0, %s176
      %s178 = sphi 0, %s176
      %s179 = sphi 0, %s178
      %s193 = sphi 0, %s179
      %s197 = sphi 0, %s197
      %s199 = sphi 0, %s197
      %s200 = sphi 0, %s199
      %s214 = sphi 0, %s200
      %s222 = sphi 0, %s224
      %s225 = sphi 0, %s222
      %s226 = sphi 0, %s225
      %s242 = sphi 0, %s226
    $region4: #{tpu_custom_call.1} parent=1 // loop_header_branch
      %21 = sbr.rel (%p19) target = $region8
    $region5: #{tpu_custom_call.1} parent=1 // loop_body
      %s23 = ssub.s32 %s18, 1
      %s24 = ssub.s32 %s18, 2
      %s31 = sadd.s32 1, %s26
      %p32 = scmp.ge.s32.totalorder %s31, 1
      %s33 = scalar_select %p32, 0, %s31
      %s34 = sadd.s32 1, %s25
      %s35 = scalar_select %p32, %s34, %s25
      %p36 = scmp.ge.s32.totalorder %s35, 2
      %s37 = scalar_select %p36, 0, %s35
      %s38 = ssub.s32 %s25, %s37
      %s39 = ssub.s32 %s26, %s33
      %s40 = sor.u32 %s38, %s39
      %p41 = scmp.eq.s32.totalorder %s40, 0
      %s43 = sadd.s32 %s42, 1
      %s44 = scalar_select %p41, %s42, %s43
      %p47 = pneg %p41
      %p48 = scmp.eq.s32.totalorder %s18, 1
      %p49 = por %p47, %p48
      %p50 = scmp.ne.s32.totalorder %s42, %s45
      %p51 = scmp.eq.s32.totalorder %s18, 0
      %p52 = por %p50, %p51
      %p53 = scmp.ne.s32.totalorder %s42, %s45
      %p54 = scmp.eq.s32.totalorder %s23, 1
      %p55 = por %p53, %p54
      %p56 = scmp.ne.s32.totalorder %s45, %s46
      %p57 = scmp.eq.s32.totalorder %s23, 0
      %p58 = por %p56, %p57
      %p59 = scmp.ne.s32.totalorder %s45, %s46
      %p60 = scmp.eq.s32.totalorder %s24, 1
      %p61 = por %p59, %p60
      %p63 = scmp.ne.s32.totalorder %s46, %s62
      %p64 = scmp.eq.s32.totalorder %s24, 0
      %p65 = por %p63, %p64
      %s66 = ssub.s32 %s25, %s37
      %p67 = scmp.eq.s32.totalorder %s66, 0
      %s69 = sadd.s32 %s68, 1
      %s70 = scalar_select %p67, %s68, %s69
      %p73 = pneg %p67
      %p74 = scmp.eq.s32.totalorder %s18, 1
      %p75 = por %p73, %p74
      %p76 = scmp.ne.s32.totalorder %s68, %s71
      %p77 = scmp.eq.s32.totalorder %s18, 0
      %p78 = por %p76, %p77
      %p79 = scmp.ne.s32.totalorder %s68, %s71
      %p80 = scmp.eq.s32.totalorder %s23, 1
      %p81 = por %p79, %p80
      %p82 = scmp.ne.s32.totalorder %s71, %s72
      %p83 = scmp.eq.s32.totalorder %s23, 0
      %p84 = por %p82, %p83
      %p85 = scmp.ne.s32.totalorder %s71, %s72
      %p86 = scmp.eq.s32.totalorder %s24, 1
      %p87 = por %p85, %p86
      %p89 = scmp.ne.s32.totalorder %s72, %s88
      %p90 = scmp.eq.s32.totalorder %s24, 0
      %p91 = por %p89, %p90
      %s93 = sadd.s32 %s92, 1
      %p96 = scmp.eq.s32.totalorder %s18, 1
      %p97 = scmp.ne.s32.totalorder %s92, %s94
      %p98 = scmp.eq.s32.totalorder %s18, 0
      %p99 = por %p97, %p98
      %p100 = scmp.ne.s32.totalorder %s92, %s94
      %p101 = scmp.eq.s32.totalorder %s23, 1
      %p102 = por %p100, %p101
      %p103 = scmp.ne.s32.totalorder %s94, %s95
      %p104 = scmp.eq.s32.totalorder %s23, 0
      %p105 = por %p103, %p104
      %p106 = scmp.ne.s32.totalorder %s94, %s95
      %p107 = scmp.eq.s32.totalorder %s24, 1
      %p108 = por %p106, %p107
      %p110 = scmp.ne.s32.totalorder %s95, %s109
      %p111 = scmp.eq.s32.totalorder %s24, 0
      %p112 = por %p110, %p111
      %s114 = sadd.s32 %s113, 1
      %p117 = scmp.eq.s32.totalorder %s18, 1
      %p118 = scmp.ne.s32.totalorder %s113, %s115
      %p119 = scmp.eq.s32.totalorder %s18, 0
      %p120 = por %p118, %p119
      %p121 = scmp.ne.s32.totalorder %s113, %s115
      %p122 = scmp.eq.s32.totalorder %s23, 1
      %p123 = por %p121, %p122
      %p124 = scmp.ne.s32.totalorder %s115, %s116
      %p125 = scmp.eq.s32.totalorder %s23, 0
      %p126 = por %p124, %p125
      %p127 = scmp.ne.s32.totalorder %s115, %s116
      %p128 = scmp.eq.s32.totalorder %s24, 1
      %p129 = por %p127, %p128
      %p131 = scmp.ne.s32.totalorder %s116, %s130
      %p132 = scmp.eq.s32.totalorder %s24, 0
      %p133 = por %p131, %p132
      %s135 = sadd.s32 %s134, 1
      %p138 = scmp.eq.s32.totalorder %s18, 1
      %p139 = scmp.ne.s32.totalorder %s134, %s136
      %p140 = scmp.eq.s32.totalorder %s18, 0
      %p141 = por %p139, %p140
      %p142 = scmp.ne.s32.totalorder %s134, %s136
      %p143 = scmp.eq.s32.totalorder %s23, 1
      %p144 = por %p142, %p143
      %p145 = scmp.ne.s32.totalorder %s136, %s137
      %p146 = scmp.eq.s32.totalorder %s23, 0
      %p147 = por %p145, %p146
      %p148 = scmp.ne.s32.totalorder %s136, %s137
      %p149 = scmp.eq.s32.totalorder %s24, 1
      %p150 = por %p148, %p149
      %p152 = scmp.ne.s32.totalorder %s137, %s151
      %p153 = scmp.eq.s32.totalorder %s24, 0
      %p154 = por %p152, %p153
      %s156 = sadd.s32 %s155, 1
      %p159 = scmp.eq.s32.totalorder %s18, 1
      %p160 = scmp.ne.s32.totalorder %s155, %s157
      %p161 = scmp.eq.s32.totalorder %s18, 0
      %p162 = por %p160, %p161
      %p163 = scmp.ne.s32.totalorder %s155, %s157
      %p164 = scmp.eq.s32.totalorder %s23, 1
      %p165 = por %p163, %p164
      %p166 = scmp.ne.s32.totalorder %s157, %s158
      %p167 = scmp.eq.s32.totalorder %s23, 0
      %p168 = por %p166, %p167
      %p169 = scmp.ne.s32.totalorder %s157, %s158
      %p170 = scmp.eq.s32.totalorder %s24, 1
      %p171 = por %p169, %p170
      %p173 = scmp.ne.s32.totalorder %s158, %s172
      %p174 = scmp.eq.s32.totalorder %s24, 0
      %p175 = por %p173, %p174
      %s177 = sadd.s32 %s176, 1
      %p180 = scmp.eq.s32.totalorder %s18, 1
      %p181 = scmp.ne.s32.totalorder %s176, %s178
      %p182 = scmp.eq.s32.totalorder %s18, 0
      %p183 = por %p181, %p182
      %p184 = scmp.ne.s32.totalorder %s176, %s178
      %p185 = scmp.eq.s32.totalorder %s23, 1
      %p186 = por %p184, %p185
      %p187 = scmp.ne.s32.totalorder %s178, %s179
      %p188 = scmp.eq.s32.totalorder %s23, 0
      %p189 = por %p187, %p188
      %p190 = scmp.ne.s32.totalorder %s178, %s179
      %p191 = scmp.eq.s32.totalorder %s24, 1
      %p192 = por %p190, %p191
      %p194 = scmp.ne.s32.totalorder %s179, %s193
      %p195 = scmp.eq.s32.totalorder %s24, 0
      %p196 = por %p194, %p195
      %s198 = sadd.s32 %s197, 1
      %p201 = scmp.eq.s32.totalorder %s18, 1
      %p202 = scmp.ne.s32.totalorder %s197, %s199
      %p203 = scmp.eq.s32.totalorder %s18, 0
      %p204 = por %p202, %p203
      %p205 = scmp.ne.s32.totalorder %s197, %s199
      %p206 = scmp.eq.s32.totalorder %s23, 1
      %p207 = por %p205, %p206
      %p208 = scmp.ne.s32.totalorder %s199, %s200
      %p209 = scmp.eq.s32.totalorder %s23, 0
      %p210 = por %p208, %p209
      %p211 = scmp.ne.s32.totalorder %s199, %s200
      %p212 = scmp.eq.s32.totalorder %s24, 1
      %p213 = por %p211, %p212
      %p215 = scmp.ne.s32.totalorder %s200, %s214
      %p216 = scmp.eq.s32.totalorder %s24, 0
      %p217 = por %p215, %p216
      %s218 = ssub.s32 %s25, %s37
      %s219 = ssub.s32 %s26, %s33
      %s220 = sor.u32 %s218, %s219
      %p221 = scmp.eq.s32.totalorder %s220, 0
      %s223 = sadd.s32 %s222, 1
      %s224 = scalar_select %p221, %s222, %s223
      %p227 = pneg %p221
      %p228 = scmp.eq.s32.totalorder %s18, 1
      %p229 = por %p227, %p228
      %p230 = scmp.ne.s32.totalorder %s222, %s225
      %p231 = scmp.eq.s32.totalorder %s18, 0
      %p232 = por %p230, %p231
      %p233 = scmp.ne.s32.totalorder %s222, %s225
      %p234 = scmp.eq.s32.totalorder %s23, 1
      %p235 = por %p233, %p234
      %p236 = scmp.ne.s32.totalorder %s225, %s226
      %p237 = scmp.eq.s32.totalorder %s23, 0
      %p238 = por %p236, %p237
      %p239 = scmp.ne.s32.totalorder %s225, %s226
      %p240 = scmp.eq.s32.totalorder %s24, 1
      %p241 = por %p239, %p240
      %p243 = scmp.ne.s32.totalorder %s226, %s242
      %p244 = scmp.eq.s32.totalorder %s24, 0
      %p245 = por %p243, %p244
      %p246 = scmp.le.s32.totalorder 1, %s18
      %p247 = scmp.lt.s32.totalorder %s18, 3
      %p248 = pnand %p246, %p247
      %p249 = pneg %p248
      // Predicated region
      $region9: #{tpu_custom_call.1} parent=5 // pred_check
        _
      $region10: #{tpu_custom_call.1} parent=5 // pred_check_branch
        %251 = sbr.rel (%p248) target = $region12
      $region11: #{tpu_custom_call.1} parent=5 // pred_region
        %s252 = ssub.s32 %s18, 1
        // Predicated region
        $region13: #{tpu_custom_call.1} parent=11 // pred_check
          %p253 = pneg %p105
        $region14: #{tpu_custom_call.1} parent=11 // pred_check_branch
          %255 = sbr.rel (%p253) target = $region16
        $region15: #{tpu_custom_call.1} parent=11 // pred_region
          _
        $region16: #{tpu_custom_call.1} parent=11 // pred_fallthru
          _
        // Predicated region
        $region17: #{tpu_custom_call.1} parent=11 // pred_check
          %p256 = pneg %p126
        $region18: #{tpu_custom_call.1} parent=11 // pred_check_branch
          %258 = sbr.rel (%p256) target = $region20
        $region19: #{tpu_custom_call.1} parent=11 // pred_region
          _
        $region20: #{tpu_custom_call.1} parent=11 // pred_fallthru
          _
        // Predicated region
        $region21: #{tpu_custom_call.1} parent=11 // pred_check
          %p259 = pneg %p147
        $region22: #{tpu_custom_call.1} parent=11 // pred_check_branch
          %261 = sbr.rel (%p259) target = $region24
        $region23: #{tpu_custom_call.1} parent=11 // pred_region
          _
        $region24: #{tpu_custom_call.1} parent=11 // pred_fallthru
          _
        // Predicated region
        $region25: #{tpu_custom_call.1} parent=11 // pred_check
          %p262 = pneg %p168
        $region26: #{tpu_custom_call.1} parent=11 // pred_check_branch
          %264 = sbr.rel (%p262) target = $region28
        $region27: #{tpu_custom_call.1} parent=11 // pred_region
          _
        $region28: #{tpu_custom_call.1} parent=11 // pred_fallthru
          _
        // Predicated region
        $region29: #{tpu_custom_call.1} parent=11 // pred_check
          %p265 = pneg %p189
        $region30: #{tpu_custom_call.1} parent=11 // pred_check_branch
          %267 = sbr.rel (%p265) target = $region32
        $region31: #{tpu_custom_call.1} parent=11 // pred_region
          _
        $region32: #{tpu_custom_call.1} parent=11 // pred_fallthru
          _
        // Predicated region
        $region33: #{tpu_custom_call.1} parent=11 // pred_check
          %p268 = pneg %p210
        $region34: #{tpu_custom_call.1} parent=11 // pred_check_branch
          %270 = sbr.rel (%p268) target = $region36
        $region35: #{tpu_custom_call.1} parent=11 // pred_region
          _
        $region36: #{tpu_custom_call.1} parent=11 // pred_fallthru
          _
      $region12: #{tpu_custom_call.1} parent=5 // pred_fallthru
        _
      %p271 = scmp.lt.s32.totalorder %s18, 2
      // Predicated region
      $region37: #{tpu_custom_call.1} parent=5 // pred_check
        %p272 = pneg %p271
      $region38: #{tpu_custom_call.1} parent=5 // pred_check_branch
        %274 = sbr.rel (%p272) target = $region40
      $region39: #{tpu_custom_call.1} parent=5 // pred_region
        // Predicated region
        $region41: #{tpu_custom_call.1} parent=39 // pred_check
          %p275 = pneg %p52
        $region42: #{tpu_custom_call.1} parent=39 // pred_check_branch
          %277 = sbr.rel (%p275) target = $region44
        $region43: #{tpu_custom_call.1} parent=39 // pred_region
          %s278 = smul.u32 2, %s26
          %p279 = scmp.lt.s32.totalorder %s25, 1
          %s280 = scalar_select %p279, %s25, 1
          %p281 = scmp.lt.s32.totalorder %s278, 1
          %s282 = scalar_select %p281, %s278, 1
          %s283 = smul.addr %s280, 2
          %s284 = sadd.s32 %s282, %s283
          %s285 = smul.addr %s284, 4
          %s286 = scalar_lea.vmem %s0, %s285
          %s287 = smul.u32 2, %s26
        $region44: #{tpu_custom_call.1} parent=39 // pred_fallthru
          _
        // Predicated region
        $region45: #{tpu_custom_call.1} parent=39 // pred_check
          %p288 = pneg %p78
        $region46: #{tpu_custom_call.1} parent=39 // pred_check_branch
          %290 = sbr.rel (%p288) target = $region48
        $region47: #{tpu_custom_call.1} parent=39 // pred_region
          %p291 = scmp.lt.s32.totalorder %s25, 1
          %s292 = scalar_select %p291, %s25, 1
          %s293 = smul.addr %s292, 4
          %s294 = smul.addr %s293, 8
          %s295 = scalar_lea.vmem %s1, %s294
        $region48: #{tpu_custom_call.1} parent=39 // pred_fallthru
          _
      $region40: #{tpu_custom_call.1} parent=5 // pred_fallthru
        _
      %p296 = scmp.le.s32.totalorder 1, %s18
      %p297 = scmp.lt.s32.totalorder %s18, 3
      %p298 = pnand %p296, %p297
      %p299 = pneg %p298
      // Predicated region
      $region49: #{tpu_custom_call.1} parent=5 // pred_check
        _
      $region50: #{tpu_custom_call.1} parent=5 // pred_check_branch
        %301 = sbr.rel (%p298) target = $region52
      $region51: #{tpu_custom_call.1} parent=5 // pred_region
        %s302 = ssub.s32 %s18, 1
        %s303 = smul.u32 2, %s28
        %p304 = scmp.lt.s32.totalorder %s27, 1
        %s305 = scalar_select %p304, %s27, 1
        %p306 = scmp.lt.s32.totalorder %s303, 1
        %s307 = scalar_select %p306, %s303, 1
        %s308 = smul.addr %s305, 2
        %s309 = sadd.s32 %s307, %s308
        %s310 = smul.addr %s309, 4
        %s311 = scalar_lea.vmem %s0, %s310
        %p312 = pneg %p58
        %p313 = pneg %p55
        %p314 = scmp.lt.s32.totalorder %s27, 1
        %s315 = scalar_select %p314, %s27, 1
        %s316 = smul.addr %s315, 4
        %s317 = smul.addr %s316, 8
        %s318 = scalar_lea.vmem %s1, %s317
        %p319 = pneg %p84
        %p320 = pneg %p81
        %p321 = pneg %p105
        %p322 = pneg %p102
        %p323 = pneg %p126
        %p324 = pneg %p123
        %p325 = pneg %p147
        %p326 = pneg %p144
        %p327 = pneg %p168
        %p328 = pneg %p165
        %p329 = pneg %p189
        %p330 = pneg %p186
        %p331 = pneg %p210
        %p332 = pneg %p207
        %p333 = pneg %p238
        %p334 = pneg %p235
        %s335 = sand.u32 %s225, 1
        %s336 = scalar_lea.sflag [#allocation5], %s335
        %s337 = sand.u32 %s225, 1
        %s338 = smul.addr %s337, 2
        %s339 = scalar_lea.vmem [#allocation4], %s338
        %s340 = smul.u32 2, %s28
        %p341 = scmp.lt.s32.totalorder %s27, 1
        %s342 = scalar_select %p341, %s27, 1
        %p343 = scmp.lt.s32.totalorder %s340, 1
        %s344 = scalar_select %p343, %s340, 1
        %s345 = smul.addr %s342, 2
        %s346 = sadd.s32 %s344, %s345
        %s347 = smul.addr %s346, 4
        %s348 = scalar_lea.vmem %s0, %s347
        %s349 = smul.u32 2, %s28
        %p350 = scmp.lt.s32.totalorder %s27, 1
        %s351 = scalar_select %p350, %s27, 1
        %s352 = smul.addr %s351, 4
        %s353 = smul.addr %s352, 8
        %s354 = scalar_lea.vmem %s1, %s353
        %s355 = smul.u32 2, %s28
        %p356 = scmp.eq.s32.totalorder %s28, 0
        // Predicated region
        $region53: #{tpu_custom_call.1} parent=51 // pred_check
          %p357 = pneg %p356
        $region54: #{tpu_custom_call.1} parent=51 // pred_check_branch
          %359 = sbr.rel (%p357) target = $region56
        $region55: #{tpu_custom_call.1} parent=51 // pred_region
          %v360 = vld [vmem:[%s354] sm:$0xff]
          %v361 = vld [vmem:[%s354 + $0x8] sm:$0xff]
          %v362 = vld [vmem:[%s354 + $0x10] sm:$0xff]
          %v363 = vld [vmem:[%s354 + $0x18] sm:$0xff]
          %vm364 = vcmask 64512
          %v365 = vsel %vm364, %v360, 0.0
          %366 = vadd.xlane.f32.xlu0 %v365
          %v367 = vpop.xlane.xlu0 %366
          %v368 = vsel %vm364, %v361, 0.0
          %369 = vadd.xlane.f32.xlu0 %v368
          %v370 = vpop.xlane.xlu0 %369
          %v371 = vsel %vm364, %v362, 0.0
          %372 = vadd.xlane.f32.xlu0 %v371
          %v373 = vpop.xlane.xlu0 %372
          %v374 = vsel %vm364, %v363, 0.0
          %375 = vadd.xlane.f32.xlu0 %v374
          %v376 = vpop.xlane.xlu0 %375
          %v377 = vrcp.pop 8.0
          %v378 = vmul.f32 %v367, %v377
          %v379 = vmul.f32 %v370, %v377
          %v380 = vmul.f32 %v373, %v377
          %v381 = vmul.f32 %v376, %v377
          %v382 = vld [vmem:[%s4] sm:$0xff]
          %v383 = vld [vmem:[%s4 + $0x8] sm:$0xff]
          %v384 = vld [vmem:[%s4 + $0x10] sm:$0xff]
          %v385 = vld [vmem:[%s4 + $0x18] sm:$0xff]
          %v386 = vld [vmem:[%s5] sm:$0xff]
          %v387 = vld [vmem:[%s5 + $0x8] sm:$0xff]
          %v388 = vld [vmem:[%s5 + $0x10] sm:$0xff]
          %v389 = vld [vmem:[%s5 + $0x18] sm:$0xff]
          %vm390 = vcmask 261120
          %v392 = vsel %vm390, %v382, 0
          %v395 = vsel %vm390, %v383, 0
          %v398 = vsel %vm390, %v384, 0
          %v401 = vsel %vm390, %v385, 0
          %403 = vmatprep.subr.mxu0 0.0
          %404 = vmatpush1.msra.mxu0 0.0
          %405 = vmatprep.subr.mxu0 0.0
          %406 = vmatpush1.msra.mxu0 0.0
          %407 = vmatprep.subr.mxu0 0.0
          %408 = vmatpush1.msra.mxu0 0.0
          %409 = vmatprep.subr.mxu0 0.0
          %410 = vmatpush1.msra.mxu0 0.0
          %411 = vmatprep.subr.mxu0 0.0
          %412 = vmatpush1.msra.mxu0 0.0
          %413 = vmatprep.subr.mxu0 0.0
          %414 = vmatpush1.msra.mxu0 0.0
          %415 = vmatprep.subr.mxu0 0.0
          %416 = vmatpush1.msra.mxu0 0.0
          %417 = vmatprep.subr.mxu0 0.0
          %418 = vmatpush1.msra.mxu0 0.0
          %419 = vmatprep.subr.mxu0 0.0
          %420 = vmatpush1.msra.mxu0 0.0
          %421 = vmatprep.subr.mxu0 0.0
          %422 = vmatpush1.msra.mxu0 0.0
          %423 = vmatprep.subr.mxu0 0.0
          %424 = vmatpush1.msra.mxu0 0.0
          %425 = vmatprep.subr.mxu0 0.0
          %426 = vmatpush1.msra.mxu0 0.0
          %427 = vmatprep.subr.mxu0 0.0
          %428 = vmatpush1.msra.mxu0 %v381
          %429 = vmatprep.subr.mxu0 0.0
          %430 = vmatpush1.msra.mxu0 %v380
          %431 = vmatprep.subr.mxu0 0.0
          %432 = vmatpush1.msra.mxu0 %v379
          %433 = vmatprep.subr.mxu0 0.0
          %434 = vmatpush1.msra.mxu0 %v378
          %435 = vmatprep.subr.mxu0 0.0
          %436 = vmatpush2.msra.mxu0 0.0
          %437 = vmatprep.subr.mxu0 0.0
          %438 = vmatpush2.msra.mxu0 0.0
          %439 = vmatprep.subr.mxu0 0.0
          %440 = vmatpush2.msra.mxu0 0.0
          %441 = vmatprep.subr.mxu0 0.0
          %442 = vmatpush2.msra.mxu0 0.0
          %443 = vmatprep.subr.mxu0 0.0
          %444 = vmatpush2.msra.mxu0 0.0
          %445 = vmatprep.subr.mxu0 0.0
          %446 = vmatpush2.msra.mxu0 0.0
          %447 = vmatprep.subr.mxu0 0.0
          %448 = vmatpush2.msra.mxu0 0.0
          %449 = vmatprep.subr.mxu0 0.0
          %450 = vmatpush2.msra.mxu0 0.0
          %451 = vmatprep.subr.mxu0 0.0
          %452 = vmatpush2.msra.mxu0 0.0
          %453 = vmatprep.subr.mxu0 0.0
          %454 = vmatpush2.msra.mxu0 0.0
          %455 = vmatprep.subr.mxu0 0.0
          %456 = vmatpush2.msra.mxu0 0.0
          %457 = vmatprep.subr.mxu0 0.0
          %458 = vmatpush2.msra.mxu0 0.0
          %459 = vmatprep.subr.mxu0 0.0
          %460 = vmatpush2.msra.mxu0 0.0
          %461 = vmatprep.subr.mxu0 0.0
          %462 = vmatpush2.msra.mxu0 0.0
          %463 = vmatprep.subr.mxu0 0.0
          %464 = vmatpush2.msra.mxu0 0.0
          %465 = vmatprep.subr.mxu0 0.0
          %466 = vmatpush2.msra.mxu0 0.0
          %467 = vmatprep.mubr.f32.mxu0 0.0
          %468 = vmatmul.mubr.f32.gmra.mxu0 %v392
          %v469 = vpop.f32.mrf.mxu0
          %v470 = vadd.f32 %v386, %v469
          %v471 = vpop.f32.mrf.mxu0
          %472 = vmatprep.mubr.f32.mxu0 0.0
          %473 = vmatmul.mubr.f32.gmra.mxu0 %v395
          %v474 = vpop.f32.mrf.mxu0
          %v475 = vadd.f32 %v387, %v474
          %v476 = vpop.f32.mrf.mxu0
          %477 = vmatprep.mubr.f32.mxu0 0.0
          %478 = vmatmul.mubr.f32.gmra.mxu0 %v398
          %v479 = vpop.f32.mrf.mxu0
          %v480 = vadd.f32 %v388, %v479
          %v481 = vpop.f32.mrf.mxu0
          %482 = vmatprep.mubr.f32.mxu0 0.0
          %483 = vmatmul.mubr.f32.gmra.mxu0 %v401
          %v484 = vpop.f32.mrf.mxu0
          %v485 = vadd.f32 %v389, %v484
          %v486 = vpop.f32.mrf.mxu0
          %487 = vdwg.mxu0
          %v488 = vtanh.pop %v470
          %v489 = vtanh.pop %v475
          %v490 = vtanh.pop %v480
          %v491 = vtanh.pop %v485
          %vm492 = vcmask 7168
          %493 = vst.msk [vmem:[#allocation2] sm:$0xff] %vm492, %v488
          %494 = vst.msk [vmem:[#allocation2 + $0x8] sm:$0xff] %vm492, %v489
          %495 = vst.msk [vmem:[#allocation2 + $0x10] sm:$0xff] %vm492, %v490
          %496 = vst.msk [vmem:[#allocation2 + $0x18] sm:$0xff] %vm492, %v491
        $region56: #{tpu_custom_call.1} parent=51 // pred_fallthru
          _
        %v497 = vld [vmem:[%s348] sm:$0xff]
        %v498 = vld [vmem:[%s2] sm:$0xff]
        %v499 = vld [vmem:[%s2 + $0x8] sm:$0xff]
        %v500 = vld [vmem:[%s2 + $0x10] sm:$0xff]
        %v501 = vld [vmem:[%s2 + $0x18] sm:$0xff]
        %v502 = vld [vmem:[%s3] sm:$0xff]
        %v503 = vld [vmem:[%s3 + $0x8] sm:$0xff]
        %v504 = vld [vmem:[%s3 + $0x10] sm:$0xff]
        %v505 = vld [vmem:[%s3 + $0x18] sm:$0xff]
        %507 = vset.pattern.permute.xlu0 0
        %508 = vperm.xlu0 %507, %v502
        %v509 = vpop.permute.xlu0 %508
        %512 = vset.pattern.permute.xlu0 0
        %513 = vperm.xlu0 %512, %v503
        %v514 = vpop.permute.xlu0 %513
        %517 = vset.pattern.permute.xlu0 0
        %518 = vperm.xlu0 %517, %v504
        %v519 = vpop.permute.xlu0 %518
        %522 = vset.pattern.permute.xlu0 0
        %523 = vperm.xlu0 %522, %v505
        %v524 = vpop.permute.xlu0 %523
        %v527 = vcombine.high %v497, %v497
        %vm528 = vcmask 31744
        %v530 = vsel %vm528, %v498, 0
        %v533 = vsel %vm528, %v499, 0
        %v536 = vsel %vm528, %v500, 0
        %v539 = vsel %vm528, %v501, 0
        %vm541 = vcmask 1043456
        %v542 = vsel %vm541, %v497, 0
        %v544 = vsel %vm541, %v527, 0
        %546 = vmatprep.subr.mxu0 0.0
        %547 = vmatpush1.msra.mxu0 0.0
        %548 = vmatprep.subr.mxu0 0.0
        %549 = vmatpush1.msra.mxu0 0.0
        %550 = vmatprep.subr.mxu0 0.0
        %551 = vmatpush1.msra.mxu0 0.0
        %552 = vmatprep.subr.mxu0 0.0
        %553 = vmatpush1.msra.mxu0 0.0
        %554 = vmatprep.subr.mxu0 0.0
        %555 = vmatpush1.msra.mxu0 0.0
        %556 = vmatprep.subr.mxu0 0.0
        %557 = vmatpush1.msra.mxu0 0.0
        %558 = vmatprep.subr.mxu0 0.0
        %559 = vmatpush1.msra.mxu0 0.0
        %560 = vmatprep.subr.mxu0 0.0
        %561 = vmatpush1.msra.mxu0 0.0
        %562 = vmatprep.subr.mxu0 0.0
        %563 = vmatpush1.msra.mxu0 0.0
        %564 = vmatprep.subr.mxu0 0.0
        %565 = vmatpush1.msra.mxu0 0.0
        %566 = vmatprep.subr.mxu0 0.0
        %567 = vmatpush1.msra.mxu0 0.0
        %568 = vmatprep.subr.mxu0 0.0
        %569 = vmatpush1.msra.mxu0 0.0
        %570 = vmatprep.subr.mxu0 0.0
        %571 = vmatpush1.msra.mxu0 0.0
        %572 = vmatprep.subr.mxu0 0.0
        %573 = vmatpush1.msra.mxu0 0.0
        %574 = vmatprep.subr.mxu0 0.0
        %575 = vmatpush1.msra.mxu0 0.0
        %576 = vmatprep.subr.mxu0 %v544
        %577 = vmatpush1.msra.mxu0 %v542
        %578 = vmatprep.subr.mxu0 0.0
        %579 = vmatpush2.msra.mxu0 0.0
        %580 = vmatprep.subr.mxu0 0.0
        %581 = vmatpush2.msra.mxu0 0.0
        %582 = vmatprep.subr.mxu0 0.0
        %583 = vmatpush2.msra.mxu0 0.0
        %584 = vmatprep.subr.mxu0 0.0
        %585 = vmatpush2.msra.mxu0 0.0
        %586 = vmatprep.subr.mxu0 0.0
        %587 = vmatpush2.msra.mxu0 0.0
        %588 = vmatprep.subr.mxu0 0.0
        %589 = vmatpush2.msra.mxu0 0.0
        %590 = vmatprep.subr.mxu0 0.0
        %591 = vmatpush2.msra.mxu0 0.0
        %592 = vmatprep.subr.mxu0 0.0
        %593 = vmatpush2.msra.mxu0 0.0
        %594 = vmatprep.subr.mxu0 0.0
        %595 = vmatpush2.msra.mxu0 0.0
        %596 = vmatprep.subr.mxu0 0.0
        %597 = vmatpush2.msra.mxu0 0.0
        %598 = vmatprep.subr.mxu0 0.0
        %599 = vmatpush2.msra.mxu0 0.0
        %600 = vmatprep.subr.mxu0 0.0
        %601 = vmatpush2.msra.mxu0 0.0
        %602 = vmatprep.subr.mxu0 0.0
        %603 = vmatpush2.msra.mxu0 0.0
        %604 = vmatprep.subr.mxu0 0.0
        %605 = vmatpush2.msra.mxu0 0.0
        %606 = vmatprep.subr.mxu0 0.0
        %607 = vmatpush2.msra.mxu0 0.0
        %608 = vmatprep.subr.mxu0 0.0
        %609 = vmatpush2.msra.mxu0 0.0
        %610 = vmatprep.mubr.f32.mxu0 0.0
        %611 = vmatmul.mubr.f32.gmra.mxu0 %v530
        %v612 = vpop.f32.mrf.mxu0
        %v613 = vadd.f32 %v509, %v612
        %v614 = vpop.f32.mrf.mxu0
        %v615 = vadd.f32 %v509, %v614
        %616 = vmatprep.mubr.f32.mxu0 0.0
        %617 = vmatmul.mubr.f32.gmra.mxu0 %v533
        %v618 = vpop.f32.mrf.mxu0
        %v619 = vadd.f32 %v514, %v618
        %v620 = vpop.f32.mrf.mxu0
        %v621 = vadd.f32 %v514, %v620
        %622 = vmatprep.mubr.f32.mxu0 0.0
        %623 = vmatmul.mubr.f32.gmra.mxu0 %v536
        %v624 = vpop.f32.mrf.mxu0
        %v625 = vadd.f32 %v519, %v624
        %v626 = vpop.f32.mrf.mxu0
        %v627 = vadd.f32 %v519, %v626
        %628 = vmatprep.mubr.f32.mxu0 0.0
        %629 = vmatmul.mubr.f32.gmra.mxu0 %v539
        %v630 = vpop.f32.mrf.mxu0
        %v631 = vadd.f32 %v524, %v630
        %v632 = vpop.f32.mrf.mxu0
        %v633 = vadd.f32 %v524, %v632
        %634 = vdwg.mxu0
        %v635 = vmax.f32 %v613, 0.0
        %v636 = vmax.f32 %v615, 0.0
        %v637 = vmax.f32 %v619, 0.0
        %v638 = vmax.f32 %v621, 0.0
        %v639 = vmax.f32 %v625, 0.0
        %v640 = vmax.f32 %v627, 0.0
        %v641 = vmax.f32 %v631, 0.0
        %v642 = vmax.f32 %v633, 0.0
        %v643 = vld [vmem:[#allocation2] sm:$0xff]
        %v644 = vld [vmem:[#allocation2 + $0x8] sm:$0xff]
        %v645 = vld [vmem:[#allocation2 + $0x10] sm:$0xff]
        %v646 = vld [vmem:[#allocation2 + $0x18] sm:$0xff]
        %648 = vset.pattern.permute.xlu0 0
        %649 = vperm.xlu0 %648, %v643
        %v650 = vpop.permute.xlu0 %649
        %653 = vset.pattern.permute.xlu0 0
        %654 = vperm.xlu0 %653, %v644
        %v655 = vpop.permute.xlu0 %654
        %658 = vset.pattern.permute.xlu0 0
        %659 = vperm.xlu0 %658, %v645
        %v660 = vpop.permute.xlu0 %659
        %663 = vset.pattern.permute.xlu0 0
        %664 = vperm.xlu0 %663, %v646
        %v665 = vpop.permute.xlu0 %664
        %v667 = vmul.f32 %v635, %v650
        %v668 = vmul.f32 %v636, %v650
        %v669 = vmul.f32 %v637, %v655
        %v670 = vmul.f32 %v638, %v655
        %v671 = vmul.f32 %v639, %v660
        %v672 = vmul.f32 %v640, %v660
        %v673 = vmul.f32 %v641, %v665
        %v674 = vmul.f32 %v642, %v665
        %v675 = vmax.f32 %v667, 0.0
        %v676 = vmax.f32 %v668, 0.0
        %v677 = vmax.f32 %v669, 0.0
        %v678 = vmax.f32 %v670, 0.0
        %v679 = vmax.f32 %v671, 0.0
        %v680 = vmax.f32 %v672, 0.0
        %v681 = vmax.f32 %v673, 0.0
        %v682 = vmax.f32 %v674, 0.0
        %v683 = vld [vmem:[%s6] sm:$0x1]
        %s684 = sld [smem:[#allocation3]]
        %v685 = vstv %s684
        %vm686 = vcmask 261120
        %v688 = vsel %vm686, %v683, 0
        %690 = vmatprep.subr.mxu0 0.0
        %691 = vmatpush1.msra.mxu0 0.0
        %692 = vmatprep.subr.mxu0 0.0
        %693 = vmatpush1.msra.mxu0 0.0
        %694 = vmatprep.subr.mxu0 0.0
        %695 = vmatpush1.msra.mxu0 0.0
        %696 = vmatprep.subr.mxu0 0.0
        %697 = vmatpush1.msra.mxu0 0.0
        %698 = vmatprep.subr.mxu0 0.0
        %699 = vmatpush1.msra.mxu0 0.0
        %700 = vmatprep.subr.mxu0 0.0
        %701 = vmatpush1.msra.mxu0 0.0
        %702 = vmatprep.subr.mxu0 0.0
        %703 = vmatpush1.msra.mxu0 0.0
        %704 = vmatprep.subr.mxu0 0.0
        %705 = vmatpush1.msra.mxu0 0.0
        %706 = vmatprep.subr.mxu0 0.0
        %707 = vmatpush1.msra.mxu0 0.0
        %708 = vmatprep.subr.mxu0 0.0
        %709 = vmatpush1.msra.mxu0 0.0
        %710 = vmatprep.subr.mxu0 0.0
        %711 = vmatpush1.msra.mxu0 0.0
        %712 = vmatprep.subr.mxu0 0.0
        %713 = vmatpush1.msra.mxu0 0.0
        %714 = vmatprep.subr.mxu0 %v682
        %715 = vmatpush1.msra.mxu0 %v681
        %716 = vmatprep.subr.mxu0 %v680
        %717 = vmatpush1.msra.mxu0 %v679
        %718 = vmatprep.subr.mxu0 %v678
        %719 = vmatpush1.msra.mxu0 %v677
        %720 = vmatprep.subr.mxu0 %v676
        %721 = vmatpush1.msra.mxu0 %v675
        %722 = vmatprep.subr.mxu0 0.0
        %723 = vmatpush2.msra.mxu0 0.0
        %724 = vmatprep.subr.mxu0 0.0
        %725 = vmatpush2.msra.mxu0 0.0
        %726 = vmatprep.subr.mxu0 0.0
        %727 = vmatpush2.msra.mxu0 0.0
        %728 = vmatprep.subr.mxu0 0.0
        %729 = vmatpush2.msra.mxu0 0.0
        %730 = vmatprep.subr.mxu0 0.0
        %731 = vmatpush2.msra.mxu0 0.0
        %732 = vmatprep.subr.mxu0 0.0
        %733 = vmatpush2.msra.mxu0 0.0
        %734 = vmatprep.subr.mxu0 0.0
        %735 = vmatpush2.msra.mxu0 0.0
        %736 = vmatprep.subr.mxu0 0.0
        %737 = vmatpush2.msra.mxu0 0.0
        %738 = vmatprep.subr.mxu0 0.0
        %739 = vmatpush2.msra.mxu0 0.0
        %740 = vmatprep.subr.mxu0 0.0
        %741 = vmatpush2.msra.mxu0 0.0
        %742 = vmatprep.subr.mxu0 0.0
        %743 = vmatpush2.msra.mxu0 0.0
        %744 = vmatprep.subr.mxu0 0.0
        %745 = vmatpush2.msra.mxu0 0.0
        %746 = vmatprep.subr.mxu0 0.0
        %747 = vmatpush2.msra.mxu0 0.0
        %748 = vmatprep.subr.mxu0 0.0
        %749 = vmatpush2.msra.mxu0 0.0
        %750 = vmatprep.subr.mxu0 0.0
        %751 = vmatpush2.msra.mxu0 0.0
        %752 = vmatprep.subr.mxu0 0.0
        %753 = vmatpush2.msra.mxu0 0.0
        %754 = vmatprep.mubr.f32.mxu0 0.0
        %755 = vmatmul.mubr.f32.gmra.mxu0 %v688
        %v756 = vpop.f32.mrf.mxu0
        %v757 = vadd.f32 %v685, %v756
        %v758 = vpop.f32.mrf.mxu0
        %v759 = vadd.f32 %v685, %v758
        %760 = vdwg.mxu0
        %v763 = vcombine.low %v757, %v759
        %v765 = vunpack.c.l.s4 1966171168
        %v766 = vunpack.c.0.s8 %v765
        %v767 = vlaneseq
        %v768 = vshrl.u32 %v767, 7
        %v769 = vsub.s32 %v766, %v768
        %v770 = vrot.slane %v763, %v769
        %v772 = vunpack.c.l.s4 1966171168
        %v773 = vunpack.c.0.s8 %v772
        %v774 = vlaneseq
        %v775 = vshrl.u32 %v774, 7
        %v776 = vsub.s32 %v773, %v775
        %v777 = vrot.slane %v770, %v776
        %v779 = vlaneseq
        %vm780 = vcmp.ge.s32.totalorder %v779, 0
        %vm781 = vcmp.lt.s32.totalorder %v779, 256
        %vm782 = vmand %vm780, %vm781
        %783 = vst.msk [vmem:[%s339] sm:$0x3] %vm782, %v777
        %s784 = sand.u32 %s225, 1
        %s785 = scalar_lea.sflag [#allocation5], %s784
        %s786 = sand.u32 %s225, 1
        %s787 = smul.addr %s786, 2
        %s788 = scalar_lea.vmem [#allocation4], %s787
        // Predicated region
        $region57: #{tpu_custom_call.1} parent=51 // pred_check
          %p789 = pneg %p235
        $region58: #{tpu_custom_call.1} parent=51 // pred_check_branch
          %791 = sbr.rel (%p789) target = $region60
        $region59: #{tpu_custom_call.1} parent=51 // pred_region
          %s792 = smul.u32 2, %s28
          %s794 = ssub.s32 32, 32
          %795 = vsyncadd %s785, %s794
          %s796 = smul.addr %s27, 2
          %s797 = sadd.s32 %s792, %s796
          %s798 = smul.addr %s797, 16
          %s799 = scalar_lea.hbm %s8, %s798
          %s801 = sshll.u32 %s788, 4
          %s802 = int_to_ptr.vmem [resolvable:$true] %s801
          %804 = dma.vmem_to_hbm [thread:$0]  %s802, 32, %s799, %s785
        $region60: #{tpu_custom_call.1} parent=51 // pred_fallthru
          _
      $region52: #{tpu_custom_call.1} parent=5 // pred_fallthru
        _
      %p805 = scmp.le.s32.totalorder 2, %s18
      // Predicated region
      $region61: #{tpu_custom_call.1} parent=5 // pred_check
        %p806 = pneg %p805
      $region62: #{tpu_custom_call.1} parent=5 // pred_check_branch
        %808 = sbr.rel (%p806) target = $region64
      $region63: #{tpu_custom_call.1} parent=5 // pred_region
        %s809 = ssub.s32 %s18, 2
        // Predicated region
        $region65: #{tpu_custom_call.1} parent=63 // pred_check
          %p810 = pneg %p241
        $region66: #{tpu_custom_call.1} parent=63 // pred_check_branch
          %812 = sbr.rel (%p810) target = $region68
        $region67: #{tpu_custom_call.1} parent=63 // pred_region
          %s813 = sand.u32 %s226, 1
          %s814 = scalar_lea.sflag [#allocation5], %s813
          %s815 = sand.u32 %s226, 1
          %s816 = smul.addr %s815, 2
          %s817 = scalar_lea.vmem [#allocation4], %s816
          %818 = dma.done %s814, 32
        $region68: #{tpu_custom_call.1} parent=63 // pred_fallthru
          _
      $region64: #{tpu_custom_call.1} parent=5 // pred_fallthru
        _
    $region6: #{tpu_custom_call.1} parent=1 // loop_footer
      %s22 = sadd.s32 1, %s18
    $region7: #{tpu_custom_call.1} parent=1 // loop_footer_branch
      %17 = sbr.rel target = $region3
    $region8: #{tpu_custom_call.1} parent=1 // loop_exit
      _
    %819 = vsyncpa [#allocation5], 1
    %s820 = scalar_lea.sflag [#allocation5], 1
    %821 = vsyncpa %s820, 1

</llo_original>
